<compile_context>
chip_gen: v6e
topology: v6e:2x2x1
jax: 0.10.0
libtpu: 0.0.40
codegen_flags: <defaults>
</compile_context>

<pallas_src>
import functools

import jax
import jax.numpy as jnp
from jax import lax
from jax.experimental import pallas as pl
from jax.experimental.pallas import tpu as pltpu

_MIB = 1024 * 1024


def _device_kind():
    try:
        return jax.devices()[0].device_kind.lower()
    except Exception:
        return ""


def _vmem_capacity_bytes():
    try:
        return int(pltpu.get_tpu_info().vmem_capacity_bytes)
    except Exception:
        return 64 * _MIB  # conservative default (v7x per-core VMEM)


def _pick_row_block(b, d, max_tb, vmem_cap):
    """Query row-block size: divides b; multiples of 32 keep the dynamic bf16
    sublane slice of the resident keys tile-aligned; sized against VMEM."""
    if b <= max_tb:
        return b
    cands = [c for c in (256, 128, 64, 32) if c <= max_tb and b % c == 0]
    if not cands:
        return b  # single block per half (block == full dims is always legal)
    keys_bytes = 2 * b * d * 2                     # resident bf16 keys, 1 buffer
    for c in cands:                                # descending: biggest that fits
        temp_bytes = 3 * c * b * 4 + 2 * c * d * 2
        if keys_bytes + temp_bytes + 4 * _MIB <= int(0.85 * vmem_cap):
            return c
    # TODO(synk): add a key-tiled fallback (third "arbitrary" grid axis over key
    # column blocks + resident row_sum accumulator) for B*D too large for
    # resident keys on v7x.
    return cands[-1]


def _resident_spec(block_shape, index_map):
    """Constant-index resident block: a single VMEM buffer suffices (DMA'd once)."""
    try:
        return pl.BlockSpec(block_shape, index_map, pipeline_mode=pl.Buffered(1))
    except Exception:  # older jax without pipeline_mode support
        return pl.BlockSpec(block_shape, index_map)


def _prep_kernel(inv_sqrt_t, ei_ref, ej_ref, zs_ref, pos_ref):
    # ei/ej : (tb, D) f32 row blocks of emb_i / emb_j
    # zs    : (2, tb, D) bf16 out -- exp-normalized reps scaled by rsqrt(t)
    # pos   : (tb, 1)  f32 out -- positives / temperature
    def scaled(x):
        e = jnp.exp(x)
        ssq = jnp.sum(e * e, axis=1, keepdims=True)
        # F.normalize(dim=1) clamps the norm at eps=1e-12 -> clamp ssq at 1e-24.
        return e * (inv_sqrt_t * lax.rsqrt(jnp.maximum(ssq, 1e-24)))

    zi = scaled(ei_ref[...].astype(jnp.float32))
    zj = scaled(ej_ref[...].astype(jnp.float32))
    # (rsqrt(t))^2 is folded into both operands, so this is positives / t.
    pos_ref[...] = jnp.sum(zi * zj, axis=1, keepdims=True)
    zs_ref[0] = zi.astype(jnp.bfloat16)
    zs_ref[1] = zj.astype(jnp.bfloat16)


def _loss_kernel(exp_dtype, keys_ref, pos_ref, out_ref):
    # keys_ref : (2, B, D) bf16, VMEM-resident (constant index_map, Buffered(1))
    # pos_ref  : (tb, 1)  f32 positives / t for this query row block
    # out_ref  : (1, tb, 1) f32 per-row loss
    _, b, _ = keys_ref.shape
    tb = pos_ref.shape[0]
    h = pl.program_id(0)                       # which half the queries come from
    i = pl.program_id(1)                       # query row block within that half
    row0 = pl.multiple_of(i * tb, tb)

    # Query rows are a slice of the resident keys -- no separate HBM read.
    zq = keys_ref[h, pl.ds(row0, tb), :]       # (tb, D) bf16

    rows = lax.broadcasted_iota(jnp.int32, (tb, b), 0)
    cols = lax.broadcasted_iota(jnp.int32, (tb, b), 1)
    diag_col = rows + row0                     # self-similarity column (same half)
    dn = (((1,), (1,)), ((), ()))              # contract on D: zq @ keys_half.T

    def one_half(kh, row_sum):
        s = lax.dot_general(zq, keys_ref[kh], dn,
                            preferred_element_type=jnp.float32)  # (tb, b) = sim/t
        e = jnp.exp(s.astype(exp_dtype)).astype(jnp.float32)
        # negatives_mask: zero exactly the self-similarity entry exp(sim[r,r]/t).
        e = jnp.where((cols == diag_col) & (kh == h), 0.0, e)
        return row_sum + jnp.sum(e, axis=1, keepdims=True)

    # Two key halves sequentially: only one (tb, b) f32 tile + its exp is live.
    denom = lax.fori_loop(0, 2, one_half, jnp.zeros((tb, 1), jnp.float32))

    # -log(exp(pos/t) / denom) == log(denom) - pos/t  (log domain; no overflow
    # from exp(pos/t), no divide).  Matches the reference modulo masking above.
    out_ref[0] = jnp.log(denom) - pos_ref[...]


def contrastive_loss(emb_i, emb_j, temperature=0.5):
    """emb_i, emb_j: (B, D) arrays.  Returns the scalar NT-Xent loss."""
    assert emb_i.shape == emb_j.shape and emb_i.ndim == 2
    B, D = emb_i.shape
    n = 2 * B
    inv_sqrt_t = float(temperature) ** -0.5

    kind = _device_kind()
    vmem_cap = _vmem_capacity_bytes()
    # v5e: 128-wide MXU saturates at M=128 and has no bf16 EUP -> f32 exp.
    max_tb = 128 if "v5" in kind else 256
    exp_dtype = jnp.bfloat16 if ("v6" in kind or "v7" in kind) else jnp.float32

    tb = _pick_row_block(B, D, max_tb, vmem_cap)
    nb = B // tb

    emb_i = emb_i.astype(jnp.float32)
    emb_j = emb_j.astype(jnp.float32)

    # ---- kernel 1: exp -> L2 normalize -> fold rsqrt(t); positives / t -------
    zs, pos = pl.pallas_call(
        functools.partial(_prep_kernel, inv_sqrt_t),
        out_shape=(
            jax.ShapeDtypeStruct((2, B, D), jnp.bfloat16),
            jax.ShapeDtypeStruct((B, 1), jnp.float32),
        ),
        grid=(nb,),
        in_specs=[
            pl.BlockSpec((tb, D), lambda i: (i, 0)),
            pl.BlockSpec((tb, D), lambda i: (i, 0)),
        ],
        out_specs=(
            pl.BlockSpec((2, tb, D), lambda i: (0, i, 0)),
            pl.BlockSpec((tb, 1), lambda i: (i, 0)),
        ),
        compiler_params=pltpu.CompilerParams(dimension_semantics=("parallel",)),
    )(emb_i, emb_j)

    # ---- kernel 2: resident-key sim/t matmuls + masked softmax denominators --
    keys_bytes = 2 * B * D * 2
    temp_bytes = 3 * tb * B * 4 + 2 * tb * D * 2
    vmem_limit = int(min(max(keys_bytes + temp_bytes + 4 * _MIB, 32 * _MIB),
                         int(0.9 * vmem_cap)))
    cost = pl.CostEstimate(
        flops=2 * n * n * D,
        transcendentals=n * n + n,
        bytes_accessed=keys_bytes + 4 * B * 4 + n * 4,
    )

    loss_rows = pl.pallas_call(
        functools.partial(_loss_kernel, exp_dtype),
        out_shape=jax.ShapeDtypeStruct((2, B, 1), jnp.float32),
        grid=(2, nb),      # h leading: v7x's two TensorCores take one half each
        in_specs=[
            _resident_spec((2, B, D), lambda h, i: (0, 0, 0)),   # resident keys
            pl.BlockSpec((tb, 1), lambda h, i: (i, 0)),          # positives / t
        ],
        out_specs=pl.BlockSpec((1, tb, 1), lambda h, i: (h, i, 0)),
        compiler_params=pltpu.CompilerParams(
            dimension_semantics=("parallel", "parallel"),
            vmem_limit_bytes=vmem_limit,
        ),
        cost_estimate=cost,
    )(zs, pos)

    # Final scalar mean over the 2B per-row losses (trivial O(n) glue reduce).
    return jnp.sum(loss_rows) / n


def _reference_loss(emb_i, emb_j, temperature=0.5):
    """Pure-JAX mirror of the PyTorch forward (negatives_mask == ~eye)."""
    def normalize(x):
        nrm = jnp.sqrt(jnp.sum(x * x, axis=1, keepdims=True))
        return x / jnp.maximum(nrm, 1e-12)

    b = emb_i.shape[0]
    z = jnp.concatenate([normalize(jnp.exp(emb_i)), normalize(jnp.exp(emb_j))], 0)
    rn = jnp.maximum(jnp.linalg.norm(z, axis=1, keepdims=True), 1e-8)
    sim = (z @ z.T) / (rn * rn.T)
    n = 2 * b
    positives = jnp.concatenate(
        [jnp.diagonal(sim, offset=b), jnp.diagonal(sim, offset=-b)], 0)
    neg_mask = 1.0 - jnp.eye(n)
    nominator = jnp.exp(positives / temperature)
    denominator = jnp.sum(neg_mask * jnp.exp(sim / temperature), axis=1)
    return jnp.sum(-jnp.log(nominator / denominator)) / n


if __name__ == "__main__":
    key = jax.random.PRNGKey(0)
    k1, k2 = jax.random.split(key)
    B, D = 4, 32                  # batch_size=4 -> similarity matrix is (8, 8)
    emb_i = jax.random.normal(k1, (B, D), dtype=jnp.float32)
    emb_j = jax.random.normal(k2, (B, D), dtype=jnp.float32)

    loss = contrastive_loss(emb_i, emb_j, temperature=0.5)
    jax.block_until_ready(loss)

    ref = _reference_loss(emb_i, emb_j, temperature=0.5)
    # bf16 MXU operands (and bf16 exp on v6e/v7x) -> loosened tolerance.
    assert jnp.allclose(loss, ref, rtol=2e-2, atol=2e-2), (loss, ref)

    print("KERNEL_OK")
</pallas_src>

<mosaic_0001>
module attributes {stable_mosaic.version = 11 : i64} {
  func.func @_prep_kernel(%arg0: i32, %arg1: memref<4x32xf32, #tpu.memory_space<vmem>>, %arg2: memref<4x32xf32, #tpu.memory_space<vmem>>, %arg3: memref<2x4x32xbf16, #tpu.memory_space<vmem>>, %arg4: memref<4x1xf32, #tpu.memory_space<vmem>>) attributes {dimension_semantics = [#tpu.dimension_semantics<parallel>], iteration_bounds = array<i64: 1>, scalar_prefetch = 0 : i64, scratch_operands = 0 : i64, tpu.core_type = #tpu.core_type<tc>, window_params = [{transform_indices = @transform_0, window_bounds = array<i64: 4, 32>}, {transform_indices = @transform_1, window_bounds = array<i64: 4, 32>}, {transform_indices = @transform_2, window_bounds = array<i64: 2, 4, 32>}, {transform_indices = @transform_3, window_bounds = array<i64: 4, 1>}]} {
    %c0 = arith.constant 0 : index
    %c0_0 = arith.constant 0 : index
    %0 = vector.load %arg1[%c0, %c0_0] : memref<4x32xf32, #tpu.memory_space<vmem>>, vector<4x32xf32>
    %1 = math.exp %0 : vector<4x32xf32>
    %2 = arith.mulf %1, %1 : vector<4x32xf32>
    %cst = arith.constant dense<0.000000e+00> : vector<4xf32>
    %3 = vector.multi_reduction <add>, %2, %cst [1] : vector<4x32xf32> to vector<4xf32>
    %4 = vector.shape_cast %3 : vector<4xf32> to vector<4x1xf32>
    %cst_1 = arith.constant 1.000000e-24 : f32
    %5 = vector.broadcast %cst_1 : f32 to vector<4x1xf32>
    %6 = arith.maximumf %4, %5 : vector<4x1xf32>
    %7 = math.rsqrt %6 : vector<4x1xf32>
    %cst_2 = arith.constant 1.41421354 : f32
    %8 = vector.broadcast %cst_2 : f32 to vector<4x1xf32>
    %9 = arith.mulf %8, %7 : vector<4x1xf32>
    %10 = vector.broadcast %9 : vector<4x1xf32> to vector<4x32xf32>
    %11 = arith.mulf %1, %10 : vector<4x32xf32>
    %c0_3 = arith.constant 0 : index
    %c0_4 = arith.constant 0 : index
    %12 = vector.load %arg2[%c0_3, %c0_4] : memref<4x32xf32, #tpu.memory_space<vmem>>, vector<4x32xf32>
    %13 = math.exp %12 : vector<4x32xf32>
    %14 = arith.mulf %13, %13 : vector<4x32xf32>
    %cst_5 = arith.constant dense<0.000000e+00> : vector<4xf32>
    %15 = vector.multi_reduction <add>, %14, %cst_5 [1] : vector<4x32xf32> to vector<4xf32>
    %16 = vector.shape_cast %15 : vector<4xf32> to vector<4x1xf32>
    %cst_6 = arith.constant 1.000000e-24 : f32
    %17 = vector.broadcast %cst_6 : f32 to vector<4x1xf32>
    %18 = arith.maximumf %16, %17 : vector<4x1xf32>
    %19 = math.rsqrt %18 : vector<4x1xf32>
    %cst_7 = arith.constant 1.41421354 : f32
    %20 = vector.broadcast %cst_7 : f32 to vector<4x1xf32>
    %21 = arith.mulf %20, %19 : vector<4x1xf32>
    %22 = vector.broadcast %21 : vector<4x1xf32> to vector<4x32xf32>
    %23 = arith.mulf %13, %22 : vector<4x32xf32>
    %24 = arith.mulf %11, %23 : vector<4x32xf32>
    %cst_8 = arith.constant dense<0.000000e+00> : vector<4xf32>
    %25 = vector.multi_reduction <add>, %24, %cst_8 [1] : vector<4x32xf32> to vector<4xf32>
    %26 = vector.shape_cast %25 : vector<4xf32> to vector<4x1xf32>
    %c0_9 = arith.constant 0 : index
    %c0_10 = arith.constant 0 : index
    %27 = vector.load %arg4[%c0_9, %c0_10] : memref<4x1xf32, #tpu.memory_space<vmem>>, vector<4x1xf32>
    tpu.vector_store %arg4[%c0_9, %c0_10], %26 {strides = array<i32>} : memref<4x1xf32, #tpu.memory_space<vmem>>, vector<4x1xf32>,
    %28 = arith.truncf %11 : vector<4x32xf32> to vector<4x32xbf16>
    %c0_11 = arith.constant 0 : index
    %c0_12 = arith.constant 0 : index
    %c0_13 = arith.constant 0 : index
    %29 = vector.load %arg3[%c0_11, %c0_12, %c0_13] : memref<2x4x32xbf16, #tpu.memory_space<vmem>>, vector<1x4x32xbf16>
    %30 = vector.shape_cast %29 : vector<1x4x32xbf16> to vector<4x32xbf16>
    %31 = vector.shape_cast %28 : vector<4x32xbf16> to vector<1x4x32xbf16>
    tpu.vector_store %arg3[%c0_11, %c0_12, %c0_13], %31 {strides = array<i32>} : memref<2x4x32xbf16, #tpu.memory_space<vmem>>, vector<1x4x32xbf16>,
    %32 = arith.truncf %23 : vector<4x32xf32> to vector<4x32xbf16>
    %c1 = arith.constant 1 : index
    %c0_14 = arith.constant 0 : index
    %c0_15 = arith.constant 0 : index
    %33 = vector.load %arg3[%c1, %c0_14, %c0_15] : memref<2x4x32xbf16, #tpu.memory_space<vmem>>, vector<1x4x32xbf16>
    %34 = vector.shape_cast %33 : vector<1x4x32xbf16> to vector<4x32xbf16>
    %35 = vector.shape_cast %32 : vector<4x32xbf16> to vector<1x4x32xbf16>
    tpu.vector_store %arg3[%c1, %c0_14, %c0_15], %35 {strides = array<i32>} : memref<2x4x32xbf16, #tpu.memory_space<vmem>>, vector<1x4x32xbf16>,
    return
  }
  func.func @transform_0(%arg0: i32) -> (i32, i32) {
    %c0_i32 = arith.constant 0 : i32
    %c0_i32_0 = arith.constant 0 : i32
    return %arg0, %c0_i32 : i32, i32
  }
  func.func @transform_1(%arg0: i32) -> (i32, i32) {
    %c0_i32 = arith.constant 0 : i32
    %c0_i32_0 = arith.constant 0 : i32
    return %arg0, %c0_i32 : i32, i32
  }
  func.func @transform_2(%arg0: i32) -> (i32, i32, i32) {
    %c0_i32 = arith.constant 0 : i32
    %c0_i32_0 = arith.constant 0 : i32
    %c0_i32_1 = arith.constant 0 : i32
    return %c0_i32, %arg0, %c0_i32_0 : i32, i32, i32
  }
  func.func @transform_3(%arg0: i32) -> (i32, i32) {
    %c0_i32 = arith.constant 0 : i32
    %c0_i32_0 = arith.constant 0 : i32
    return %arg0, %c0_i32 : i32, i32
  }
}

</mosaic_0001>

<llo_original>
// kernel: tpu_custom_call.1
$region0: #{tpu_custom_call.1}
  #allocation0 [shape = 'u32[]', space=smem, size = 0x4, offset = 0x4, fixed_abs, tag = 'smem constant byte address 0x4 - core index']
  #allocation1 [shape = 'u32[144,128]{1,0:T(1,128)}', space=vmem, size = 0x12000, scoped, tag = 'internal scratch']
  %s0 = inlined_call_operand.hbm [shape: f32[4,32], index: 0, kind: input, shape index: {}]
  %s1 = inlined_call_operand.hbm [shape: f32[4,32], index: 1, kind: input, shape index: {}]
  %s2 = inlined_call_operand.hbm [shape: bf16[2,4,32], index: 2, kind: output, shape index: {0}]
  %s3 = inlined_call_operand.vmem [shape: f32[4,1], index: 3, kind: output, shape index: {1}]
  %4 = xla_tuple %s2, %s3
  %s5 = sld [smem:[#allocation0]]
  $region34: #{tpu_custom_call.1} parent=0
    _
  %s7 = ssub.s32 1, %s5
  %s8 = scalar_select 0, %s7, %s5
  $region1: #{tpu_custom_call.1} parent=0
    #allocation2 [shape = 'u8[2048]{0}', space=vmem, size = 0x800, scoped, tag = 'input window, operand 0, single buffered']
    #allocation3 [shape = 's32[1]{0}', space=sflag, size = 0x4, scoped, tag = 'scoped memory for tpu_custom_call.1']
    #allocation4 [shape = 's32[1]{0}', space=sflag, size = 0x4, scoped, tag = 'scoped memory for tpu_custom_call.1']
    #allocation5 [shape = 'u8[2048]{0}', space=vmem, size = 0x800, scoped, tag = 'input window, operand 1, single buffered']
    #allocation6 [shape = 's32[1]{0}', space=sflag, size = 0x4, scoped, tag = 'scoped memory for tpu_custom_call.1']
    #allocation7 [shape = 'u8[2048]{0}', space=vmem, size = 0x800, scoped, tag = 'output window, operand 0, single buffered']
    %9 = vsyncpa [#allocation3], 0
    %10 = vsyncpa [#allocation6], 0
    %11 = vsyncpa [#allocation4], 0
    // Predicated region
    $region2: #{tpu_custom_call.1} parent=1 // pred_check
      _
    $region3: #{tpu_custom_call.1} parent=1 // pred_check_branch
      %13 = sbr.rel (0) target = $region5
    $region4: #{tpu_custom_call.1} parent=1 // pred_region
      %s15 = ssub.s32 64, 64
      %16 = vsyncadd [#allocation3], %s15
      %s18 = sshll.u32 [#allocation2], 4
      %s19 = int_to_ptr.vmem [resolvable:$true] %s18
      %21 = dma.hbm_to_vmem [thread:$0]  %s0, 64, %s19, [#allocation3]
    $region5: #{tpu_custom_call.1} parent=1 // pred_fallthru
      _
    // Predicated region
    $region6: #{tpu_custom_call.1} parent=1 // pred_check
      _
    $region7: #{tpu_custom_call.1} parent=1 // pred_check_branch
      %23 = sbr.rel (0) target = $region9
    $region8: #{tpu_custom_call.1} parent=1 // pred_region
      %s25 = ssub.s32 64, 64
      %26 = vsyncadd [#allocation6], %s25
      %s28 = sshll.u32 [#allocation5], 4
      %s29 = int_to_ptr.vmem [resolvable:$true] %s28
      %31 = dma.hbm_to_vmem [thread:$0]  %s1, 64, %s29, [#allocation6]
    $region9: #{tpu_custom_call.1} parent=1 // pred_fallthru
      _
    // Predicated region
    $region10: #{tpu_custom_call.1} parent=1 // pred_check
      _
    $region11: #{tpu_custom_call.1} parent=1 // pred_check_branch
      %33 = sbr.rel (0) target = $region13
    $region12: #{tpu_custom_call.1} parent=1 // pred_region
      %34 = dma.done [#allocation3], 64
    $region13: #{tpu_custom_call.1} parent=1 // pred_fallthru
      _
    // Predicated region
    $region14: #{tpu_custom_call.1} parent=1 // pred_check
      _
    $region15: #{tpu_custom_call.1} parent=1 // pred_check_branch
      %36 = sbr.rel (0) target = $region17
    $region16: #{tpu_custom_call.1} parent=1 // pred_region
      %37 = dma.done [#allocation6], 64
    $region17: #{tpu_custom_call.1} parent=1 // pred_fallthru
      _
    %v38 = vld [vmem:[#allocation2] sm:$0xf]
    %v39 = vmul.f32 %v38, 1.442695
    %v40 = vpow.pop %v39
    %v41 = vmul.f32 %v40, %v40
    %vm42 = vcmask 257024
    %v43 = vsel %vm42, %v41, 0.0
    %44 = vadd.xlane.f32.xlu0 %v43
    %v45 = vpop.xlane.xlu0 %44
    %v46 = vmax.f32 %v45, 1e-24
    %v47 = vrsqrt.pop %v46
    %v48 = vmul.f32 %v47, 1.4142135
    %v49 = vmul.f32 %v40, %v48
    %v50 = vld [vmem:[#allocation5] sm:$0xf]
    %v51 = vmul.f32 %v50, 1.442695
    %v52 = vpow.pop %v51
    %v53 = vmul.f32 %v52, %v52
    %v54 = vsel %vm42, %v53, 0.0
    %55 = vadd.xlane.f32.xlu0 %v54
    %v56 = vpop.xlane.xlu0 %55
    %v57 = vmax.f32 %v56, 1e-24
    %v58 = vrsqrt.pop %v57
    %v59 = vmul.f32 %v58, 1.4142135
    %v60 = vmul.f32 %v52, %v59
    %v61 = vmul.f32 %v49, %v60
    %v62 = vsel %vm42, %v61, 0.0
    %63 = vadd.xlane.f32.xlu0 %v62
    %v64 = vpop.xlane.xlu0 %63
    %vm65 = vcmask 3072
    %66 = vst.msk [vmem:[%s3] sm:$0xf] %vm65, %v64
    %v67 = vpack.c.bf16 %v49, %v49
    %vm68 = vcmask 254976
    %69 = vst.msk [vmem:[#allocation7] sm:$0x3] %vm68, %v67
    %v70 = vpack.c.bf16 %v60, %v60
    %s71 = scalar_lea.vmem [#allocation7], 2
    %72 = vst.msk [vmem:[%s71] sm:$0x3] %vm68, %v70
    // Predicated region
    $region18: #{tpu_custom_call.1} parent=1 // pred_check
      _
    $region19: #{tpu_custom_call.1} parent=1 // pred_check_branch
      %74 = sbr.rel (0) target = $region21
    $region20: #{tpu_custom_call.1} parent=1 // pred_region
      %s76 = ssub.s32 64, 64
      %77 = vsyncadd [#allocation4], %s76
      %s78 = sshll.u32 [#allocation7], 4
      %s79 = int_to_ptr.vmem [resolvable:$true] %s78
      %84 = dma.vmem_to_hbm [thread:$0]  %s79, 64, %s2, [#allocation4], 32, 32, 2
    $region21: #{tpu_custom_call.1} parent=1 // pred_fallthru
      _
    // Predicated region
    $region22: #{tpu_custom_call.1} parent=1 // pred_check
      _
    $region23: #{tpu_custom_call.1} parent=1 // pred_check_branch
      %86 = sbr.rel (0) target = $region25
    $region24: #{tpu_custom_call.1} parent=1 // pred_region
      _
    $region25: #{tpu_custom_call.1} parent=1 // pred_fallthru
      _
    // Predicated region
    $region26: #{tpu_custom_call.1} parent=1 // pred_check
      _
    $region27: #{tpu_custom_call.1} parent=1 // pred_check_branch
      %88 = sbr.rel (0) target = $region29
    $region28: #{tpu_custom_call.1} parent=1 // pred_region
      %89 = dma.done [#allocation4], 64
    $region29: #{tpu_custom_call.1} parent=1 // pred_fallthru
      _
    // Predicated region
    $region30: #{tpu_custom_call.1} parent=1 // pred_check
      _
    $region31: #{tpu_custom_call.1} parent=1 // pred_check_branch
      %91 = sbr.rel (0) target = $region33
    $region32: #{tpu_custom_call.1} parent=1 // pred_region
      _
    $region33: #{tpu_custom_call.1} parent=1 // pred_fallthru
      _
    %92 = vsyncpa [#allocation3], 1
    %93 = vsyncpa [#allocation6], 1
    %94 = vsyncpa [#allocation4], 1

</llo_original>
